<compile_context>
chip_gen: v5e
topology: v5e:2x2
jax: 0.10.0
libtpu: 0.0.40
codegen_flags: <defaults>
</compile_context>

<pallas_src>
import jax
import jax.numpy as jnp
from jax.experimental import pallas as pl
from jax.experimental.pallas import tpu as pltpu


def _round_up(x, m):
    return -(-x // m) * m


def _cpads(C0, G, L, Ctot):
    """Per-layer live-channel count rounded up to a sublane multiple."""
    return [min(Ctot, _round_up(C0 + l * G, 8)) for l in range(L)]


def _make_dense_block_kernel(H, W, C0, G, L, cpads):
    """Builds the fused DenseBlock kernel for static (H, W, C0, G, L)."""
    HW = H * W
    Ctot = C0 + L * G

    def kernel(*refs):
        # refs = (x, scale, shift, bias, mask, w_0..w_{L-1}, out)
        x_ref, scale_ref, shift_ref, b_ref, mask_ref = refs[:5]
        w_refs = refs[5:5 + L]
        o_ref = refs[5 + L]
        # x_ref:     (1, C0, HW)        f32   one image, channels on sublanes
        # scale_ref: (L, Ctot, 1)       f32   folded BN scale, zero-padded per layer
        # shift_ref: (L, Ctot, 1)       f32   folded BN shift, zero-padded per layer
        # b_ref:     (L, G, 1)          f32   conv bias
        # mask_ref:  (9, HW)            f32   per-tap 0/1 boundary rows (conv zero pad)
        # w_refs[l]: (G, 9*cpads[l])    bf16  conv weights, K = tap*cpads[l] + c
        # o_ref:     (1, Ctot, HW)      f32   concatenated skip connections (output)

        # Output block doubles as the persistent feature store: channels
        # [0:C0) = input, channels [C0:Ctot) start at exactly zero (prevents
        # uninitialized-VMEM garbage/NaN from leaking into matmuls via the
        # sublane-rounded reads below).
        o_ref[0, :C0, :] = x_ref[0]
        if Ctot > C0:
            o_ref[0, C0:, :] = jnp.zeros((Ctot - C0, HW), dtype=o_ref.dtype)

        # Hoist the 8 off-center boundary-mask rows out of the layer loop
        # (the center tap t==4 is always valid and skips masking).
        mask_rows = {}
        for kh in range(3):
            for kw in range(3):
                t = kh * 3 + kw
                if t != 4:
                    mask_rows[t] = mask_ref[t:t + 1, :]       # (1, HW)

        for l in range(L):                                    # static unroll (L small)
            cin = C0 + l * G
            cp = cpads[l]                                      # live channels, 8-aligned

            # BN (eval, folded) + ReLU in f32 on the live channels only.
            # Channels in [cin, cp) have scale = shift = 0 and feat = 0.
            feat = o_ref[0, :cp, :]                            # (cp, HW)
            h = jnp.maximum(feat * scale_ref[l, :cp, :]
                            + shift_ref[l, :cp, :], 0.0)

            # 3x3 taps as rolls of the flattened (y*W + x) lane axis (XLU);
            # the 0/1 row masks zero row-wrap / array-wrap positions, which is
            # exactly the conv's zero padding.
            parts = []
            for kh in range(3):
                for kw in range(3):
                    t = kh * 3 + kw
                    off = (kh - 1) * W + (kw - 1)              # tap offset in flat index
                    sh = (-off) % HW                           # roll so out[p] = h[p + off]
                    r = pltpu.roll(h, sh, 1) if sh else h
                    if t != 4:
                        r = r * mask_rows[t]                   # sublane-broadcast mask
                    parts.append(r)
            # Sublane concat at cp-aligned offsets, single f32->bf16 cast.
            stack = jnp.concatenate(parts, axis=0).astype(jnp.bfloat16)   # (9*cp, HW)

            # One lane-dense MXU matmul per layer, f32 accumulation.
            out = jnp.dot(w_refs[l][...], stack,
                          preferred_element_type=jnp.float32)  # (G, HW)
            out = out + b_ref[l]                               # bias (G, 1)
            # F.dropout(..., training=False) is the identity in eval mode.

            # Append this layer's output to the skip-connection store.
            o_ref[0, cin:cin + G, :] = out.astype(o_ref.dtype)

    return kernel


def dense_block_forward(x_nchw, packed, upsample=False):
    """DenseBlock.forward. x_nchw: (N, C0, H, W) f32 -> (N, Ctot or L*G, H, W)."""
    scales, shifts, biases, mask, w_list = packed
    N, C0, H, W = x_nchw.shape
    L, Ctot, _ = scales.shape
    G = biases.shape[1]
    HW = H * W
    cpads = _cpads(C0, G, L, Ctot)

    x = x_nchw.reshape(N, C0, HW)          # free reshape; stays channel-major
    kernel = _make_dense_block_kernel(H, W, C0, G, L, cpads)

    in_specs = [
        pl.BlockSpec((1, C0, HW), lambda n: (n, 0, 0)),
        pl.BlockSpec((L, Ctot, 1), lambda n: (0, 0, 0)),
        pl.BlockSpec((L, Ctot, 1), lambda n: (0, 0, 0)),
        pl.BlockSpec((L, G, 1), lambda n: (0, 0, 0)),
        pl.BlockSpec((9, HW), lambda n: (0, 0)),
    ] + [pl.BlockSpec((G, 9 * cp), lambda n: (0, 0)) for cp in cpads]

    out = pl.pallas_call(
        kernel,
        out_shape=jax.ShapeDtypeStruct((N, Ctot, HW), x.dtype),
        grid=(N,),
        in_specs=in_specs,
        out_specs=pl.BlockSpec((1, Ctot, HW), lambda n: (n, 0, 0)),
        compiler_params=pltpu.CompilerParams(
            dimension_semantics=("parallel",)),   # one image per TC on v7x
    )(x, scales, shifts, biases, mask, *w_list)

    out = out.reshape(N, Ctot, H, W)       # already NCHW, channel order = concat order
    if upsample:
        return out[:, C0:]                 # concat(skips[1:])
    return out


def pack_params(params, C0, G, L, H, W, eps=1e-5):
    """Fold BN into scale/shift, pack per-layer conv weights, build tap masks."""
    Ctot = C0 + L * G
    HW = H * W
    cpads = _cpads(C0, G, L, Ctot)
    scales, shifts, biases, w_list = [], [], [], []
    for l, (gamma, beta, mean, var, w_oihw, b) in enumerate(params):
        cin = C0 + l * G
        cp = cpads[l]
        scale = gamma / jnp.sqrt(var + eps)
        shift = beta - mean * scale
        scales.append(jnp.pad(scale, (0, Ctot - cin)))     # zero pad -> dead chans stay 0
        shifts.append(jnp.pad(shift, (0, Ctot - cin)))
        # OIHW -> (G, kh, kw, c) -> pad c to cp -> (G, 9*cp), K = (kh*3+kw)*cp + c
        wt = jnp.transpose(w_oihw, (0, 2, 3, 1))
        wt = jnp.pad(wt, ((0, 0), (0, 0), (0, 0), (0, cp - cin)))
        w_list.append(wt.reshape(G, 9 * cp).astype(jnp.bfloat16))   # bf16 MXU operand
        biases.append(b)
    scales = jnp.stack(scales).reshape(L, Ctot, 1).astype(jnp.float32)
    shifts = jnp.stack(shifts).reshape(L, Ctot, 1).astype(jnp.float32)
    biases = jnp.stack(biases).reshape(L, G, 1).astype(jnp.float32)

    # 0/1 boundary rows for the 9 taps (implements the conv's zero padding).
    y = jnp.arange(HW) // W
    x = jnp.arange(HW) % W
    rows = []
    for kh in range(3):
        for kw in range(3):
            dy, dx = kh - 1, kw - 1
            ok = (y + dy >= 0) & (y + dy < H) & (x + dx >= 0) & (x + dx < W)
            rows.append(ok.astype(jnp.float32))
    mask = jnp.stack(rows, axis=0)                          # (9, HW)
    return scales, shifts, biases, mask, w_list


def init_params(key, in_channels, growth_rate, nb_layers):
    """Deterministic synthetic PyTorch-style parameters (BN stats + OIHW conv)."""
    params = []
    for i in range(nb_layers):
        cin = in_channels + i * growth_rate
        key, k1, k2, k3, k4, k5, k6 = jax.random.split(key, 7)
        gamma = 1.0 + 0.1 * jax.random.normal(k1, (cin,), jnp.float32)
        beta = 0.1 * jax.random.normal(k2, (cin,), jnp.float32)
        mean = 0.1 * jax.random.normal(k3, (cin,), jnp.float32)
        var = 1.0 + 0.1 * jax.random.uniform(k4, (cin,), jnp.float32)
        bound = float(1.0 / (cin * 9) ** 0.5)
        w = jax.random.uniform(k5, (growth_rate, cin, 3, 3), jnp.float32,
                               minval=-bound, maxval=bound)
        b = jax.random.uniform(k6, (growth_rate,), jnp.float32,
                               minval=-bound, maxval=bound)
        params.append((gamma, beta, mean, var, w, b))
    return params


# ---------------- pure-JAX reference (for correctness check) ----------------
def _ref_block(x_nchw, params, eps=1e-5, upsample=False):
    skips = [x_nchw]
    for (gamma, beta, mean, var, w, b) in params:
        feat = jnp.concatenate(skips, axis=1)
        scale = gamma / jnp.sqrt(var + eps)
        shift = beta - mean * scale
        h = jnp.maximum(feat * scale.reshape(1, -1, 1, 1)
                        + shift.reshape(1, -1, 1, 1), 0.0)
        # Match the kernel's numerics: bf16 matmul operands, f32 accumulation.
        h = h.astype(jnp.bfloat16).astype(jnp.float32)
        wb = w.astype(jnp.bfloat16).astype(jnp.float32)
        out = jax.lax.conv_general_dilated(
            h, wb, window_strides=(1, 1), padding=((1, 1), (1, 1)),
            dimension_numbers=("NCHW", "OIHW", "NCHW"),
            precision=jax.lax.Precision.HIGHEST)
        out = out + b.reshape(1, -1, 1, 1)
        skips.append(out)
    if upsample:
        return jnp.concatenate(skips[1:], axis=1)
    return jnp.concatenate(skips, axis=1)


if __name__ == "__main__":
    # Small shapes consistent with the module: NCHW input (2, 4, 16, 16).
    N, C0, H, W = 2, 4, 16, 16
    G, L = 4, 3                      # growth_rate, nb_layers
    upsample = False

    key = jax.random.PRNGKey(0)
    key, kx = jax.random.split(key)
    x = jax.random.normal(kx, (N, C0, H, W), jnp.float32)

    params = init_params(key, C0, G, L)
    packed = pack_params(params, C0, G, L, H, W)

    out = dense_block_forward(x, packed, upsample=upsample)
    out = jax.block_until_ready(out)

    Ctot = C0 + L * G
    expected_c = Ctot if not upsample else L * G
    assert out.shape == (N, expected_c, H, W), out.shape

    ref = _ref_block(x, params, upsample=upsample)
    # Tolerance accounts for bf16 MXU operands + differing f32 accumulation order.
    max_err = float(jnp.max(jnp.abs(out - ref)))
    assert max_err < 1e-2, f"max abs err {max_err}"

    print("KERNEL_OK")
</pallas_src>

<mosaic_0001>
module attributes {stable_mosaic.version = 11 : i64} {
  func.func @kernel(%arg0: i32, %arg1: memref<1x4x256xf32, #tpu.memory_space<vmem>>, %arg2: memref<3x16x1xf32, #tpu.memory_space<vmem>>, %arg3: memref<3x16x1xf32, #tpu.memory_space<vmem>>, %arg4: memref<3x4x1xf32, #tpu.memory_space<vmem>>, %arg5: memref<9x256xf32, #tpu.memory_space<vmem>>, %arg6: memref<4x72xbf16, #tpu.memory_space<vmem>>, %arg7: memref<4x72xbf16, #tpu.memory_space<vmem>>, %arg8: memref<4x144xbf16, #tpu.memory_space<vmem>>, %arg9: memref<1x16x256xf32, #tpu.memory_space<vmem>>) attributes {dimension_semantics = [#tpu.dimension_semantics<parallel>], iteration_bounds = array<i64: 2>, scalar_prefetch = 0 : i64, scratch_operands = 0 : i64, tpu.core_type = #tpu.core_type<tc>, window_params = [{transform_indices = @transform_0, window_bounds = array<i64: 1, 4, 256>}, {pipeline_mode = #tpu.pipeline_mode<synchronous>, transform_indices = @transform_1, window_bounds = array<i64: 3, 16, 1>}, {pipeline_mode = #tpu.pipeline_mode<synchronous>, transform_indices = @transform_2, window_bounds = array<i64: 3, 16, 1>}, {pipeline_mode = #tpu.pipeline_mode<synchronous>, transform_indices = @transform_3, window_bounds = array<i64: 3, 4, 1>}, {pipeline_mode = #tpu.pipeline_mode<synchronous>, transform_indices = @transform_4, window_bounds = array<i64: 9, 256>}, {pipeline_mode = #tpu.pipeline_mode<synchronous>, transform_indices = @transform_5, window_bounds = array<i64: 4, 72>}, {pipeline_mode = #tpu.pipeline_mode<synchronous>, transform_indices = @transform_6, window_bounds = array<i64: 4, 72>}, {pipeline_mode = #tpu.pipeline_mode<synchronous>, transform_indices = @transform_7, window_bounds = array<i64: 4, 144>}, {transform_indices = @transform_8, window_bounds = array<i64: 1, 16, 256>}]} {
    %c0 = arith.constant 0 : index
    %c0_0 = arith.constant 0 : index
    %c0_1 = arith.constant 0 : index
    %0 = vector.load %arg1[%c0, %c0_0, %c0_1] : memref<1x4x256xf32, #tpu.memory_space<vmem>>, vector<1x4x256xf32>
    %1 = vector.shape_cast %0 : vector<1x4x256xf32> to vector<4x256xf32>
    %c0_2 = arith.constant 0 : index
    %c0_3 = arith.constant 0 : index
    %c0_4 = arith.constant 0 : index
    %2 = vector.load %arg9[%c0_2, %c0_3, %c0_4] : memref<1x16x256xf32, #tpu.memory_space<vmem>>, vector<1x4x256xf32>
    %3 = vector.shape_cast %2 : vector<1x4x256xf32> to vector<4x256xf32>
    %4 = vector.shape_cast %1 : vector<4x256xf32> to vector<1x4x256xf32>
    tpu.vector_store %arg9[%c0_2, %c0_3, %c0_4], %4 {strides = array<i32>} : memref<1x16x256xf32, #tpu.memory_space<vmem>>, vector<1x4x256xf32>,
    %cst = arith.constant 0.000000e+00 : f32
    %5 = vector.broadcast %cst : f32 to vector<12x256xf32>
    %c0_5 = arith.constant 0 : index
    %c4 = arith.constant 4 : index
    %c0_6 = arith.constant 0 : index
    %6 = vector.load %arg9[%c0_5, %c4, %c0_6] : memref<1x16x256xf32, #tpu.memory_space<vmem>>, vector<1x12x256xf32>
    %7 = vector.shape_cast %6 : vector<1x12x256xf32> to vector<12x256xf32>
    %8 = vector.shape_cast %5 : vector<12x256xf32> to vector<1x12x256xf32>
    tpu.vector_store %arg9[%c0_5, %c4, %c0_6], %8 {strides = array<i32>} : memref<1x16x256xf32, #tpu.memory_space<vmem>>, vector<1x12x256xf32>,
    %c0_7 = arith.constant 0 : index
    %c0_8 = arith.constant 0 : index
    %9 = vector.load %arg5[%c0_7, %c0_8] : memref<9x256xf32, #tpu.memory_space<vmem>>, vector<1x256xf32>
    %c1 = arith.constant 1 : index
    %c0_9 = arith.constant 0 : index
    %10 = vector.load %arg5[%c1, %c0_9] : memref<9x256xf32, #tpu.memory_space<vmem>>, vector<1x256xf32>
    %c2 = arith.constant 2 : index
    %c0_10 = arith.constant 0 : index
    %11 = vector.load %arg5[%c2, %c0_10] : memref<9x256xf32, #tpu.memory_space<vmem>>, vector<1x256xf32>
    %c3 = arith.constant 3 : index
    %c0_11 = arith.constant 0 : index
    %12 = vector.load %arg5[%c3, %c0_11] : memref<9x256xf32, #tpu.memory_space<vmem>>, vector<1x256xf32>
    %c5 = arith.constant 5 : index
    %c0_12 = arith.constant 0 : index
    %13 = vector.load %arg5[%c5, %c0_12] : memref<9x256xf32, #tpu.memory_space<vmem>>, vector<1x256xf32>
    %c6 = arith.constant 6 : index
    %c0_13 = arith.constant 0 : index
    %14 = vector.load %arg5[%c6, %c0_13] : memref<9x256xf32, #tpu.memory_space<vmem>>, vector<1x256xf32>
    %c7 = arith.constant 7 : index
    %c0_14 = arith.constant 0 : index
    %15 = vector.load %arg5[%c7, %c0_14] : memref<9x256xf32, #tpu.memory_space<vmem>>, vector<1x256xf32>
    %c8 = arith.constant 8 : index
    %c0_15 = arith.constant 0 : index
    %16 = vector.load %arg5[%c8, %c0_15] : memref<9x256xf32, #tpu.memory_space<vmem>>, vector<1x256xf32>
    %c0_16 = arith.constant 0 : index
    %c0_17 = arith.constant 0 : index
    %c0_18 = arith.constant 0 : index
    %17 = vector.load %arg9[%c0_16, %c0_17, %c0_18] : memref<1x16x256xf32, #tpu.memory_space<vmem>>, vector<1x8x256xf32>
    %18 = vector.shape_cast %17 : vector<1x8x256xf32> to vector<8x256xf32>
    %c0_19 = arith.constant 0 : index
    %c0_20 = arith.constant 0 : index
    %c0_21 = arith.constant 0 : index
    %19 = vector.load %arg2[%c0_19, %c0_20, %c0_21] : memref<3x16x1xf32, #tpu.memory_space<vmem>>, vector<1x8x1xf32>
    %20 = vector.shape_cast %19 : vector<1x8x1xf32> to vector<8x1xf32>
    %21 = vector.broadcast %20 : vector<8x1xf32> to vector<8x256xf32>
    %22 = arith.mulf %18, %21 : vector<8x256xf32>
    %c0_22 = arith.constant 0 : index
    %c0_23 = arith.constant 0 : index
    %c0_24 = arith.constant 0 : index
    %23 = vector.load %arg3[%c0_22, %c0_23, %c0_24] : memref<3x16x1xf32, #tpu.memory_space<vmem>>, vector<1x8x1xf32>
    %24 = vector.shape_cast %23 : vector<1x8x1xf32> to vector<8x1xf32>
    %25 = vector.broadcast %24 : vector<8x1xf32> to vector<8x256xf32>
    %26 = arith.addf %22, %25 : vector<8x256xf32>
    %cst_25 = arith.constant 0.000000e+00 : f32
    %27 = vector.broadcast %cst_25 : f32 to vector<8x256xf32>
    %28 = arith.maximumf %26, %27 : vector<8x256xf32>
    %c17_i32 = arith.constant 17 : i32
    %29 = tpu.dynamic_rotate %28 by %c17_i32 dim 1 : vector<8x256xf32>, i32 -> vector<8x256xf32>
    %30 = vector.broadcast %9 : vector<1x256xf32> to vector<8x256xf32>
    %31 = arith.mulf %29, %30 : vector<8x256xf32>
    %c16_i32 = arith.constant 16 : i32
    %32 = tpu.dynamic_rotate %28 by %c16_i32 dim 1 : vector<8x256xf32>, i32 -> vector<8x256xf32>
    %33 = vector.broadcast %10 : vector<1x256xf32> to vector<8x256xf32>
    %34 = arith.mulf %32, %33 : vector<8x256xf32>
    %c15_i32 = arith.constant 15 : i32
    %35 = tpu.dynamic_rotate %28 by %c15_i32 dim 1 : vector<8x256xf32>, i32 -> vector<8x256xf32>
    %36 = vector.broadcast %11 : vector<1x256xf32> to vector<8x256xf32>
    %37 = arith.mulf %35, %36 : vector<8x256xf32>
    %c1_i32 = arith.constant 1 : i32
    %38 = tpu.dynamic_rotate %28 by %c1_i32 dim 1 : vector<8x256xf32>, i32 -> vector<8x256xf32>
    %39 = vector.broadcast %12 : vector<1x256xf32> to vector<8x256xf32>
    %40 = arith.mulf %38, %39 : vector<8x256xf32>
    %c255_i32 = arith.constant 255 : i32
    %41 = tpu.dynamic_rotate %28 by %c255_i32 dim 1 : vector<8x256xf32>, i32 -> vector<8x256xf32>
    %42 = vector.broadcast %13 : vector<1x256xf32> to vector<8x256xf32>
    %43 = arith.mulf %41, %42 : vector<8x256xf32>
    %c241_i32 = arith.constant 241 : i32
    %44 = tpu.dynamic_rotate %28 by %c241_i32 dim 1 : vector<8x256xf32>, i32 -> vector<8x256xf32>
    %45 = vector.broadcast %14 : vector<1x256xf32> to vector<8x256xf32>
    %46 = arith.mulf %44, %45 : vector<8x256xf32>
    %c240_i32 = arith.constant 240 : i32
    %47 = tpu.dynamic_rotate %28 by %c240_i32 dim 1 : vector<8x256xf32>, i32 -> vector<8x256xf32>
    %48 = vector.broadcast %15 : vector<1x256xf32> to vector<8x256xf32>
    %49 = arith.mulf %47, %48 : vector<8x256xf32>
    %c239_i32 = arith.constant 239 : i32
    %50 = tpu.dynamic_rotate %28 by %c239_i32 dim 1 : vector<8x256xf32>, i32 -> vector<8x256xf32>
    %51 = vector.broadcast %16 : vector<1x256xf32> to vector<8x256xf32>
    %52 = arith.mulf %50, %51 : vector<8x256xf32>
    %53 = tpu.concatenate %31, %34, %37, %40, %28, %43, %46, %49, %52 in 0 : vector<8x256xf32>, vector<8x256xf32>, vector<8x256xf32>, vector<8x256xf32>, vector<8x256xf32>, vector<8x256xf32>, vector<8x256xf32>, vector<8x256xf32>, vector<8x256xf32> -> vector<72x256xf32>
    %54 = arith.truncf %53 : vector<72x256xf32> to vector<72x256xbf16>
    %c0_26 = arith.constant 0 : index
    %c0_27 = arith.constant 0 : index
    %55 = vector.load %arg6[%c0_26, %c0_27] : memref<4x72xbf16, #tpu.memory_space<vmem>>, vector<4x72xbf16>
    %cst_28 = arith.constant dense<0.000000e+00> : vector<4x256xf32>
    %56 = tpu.matmul %55, %54, %cst_28 {dimension_numbers = #tpu.dot_dimension_numbers<[1], [0], [0], [1], [0, 0, 1, 1], [], []>} : vector<4x72xbf16>, vector<72x256xbf16>, vector<4x256xf32> -> vector<4x256xf32>
    %c0_29 = arith.constant 0 : index
    %c0_30 = arith.constant 0 : index
    %c0_31 = arith.constant 0 : index
    %57 = vector.load %arg4[%c0_29, %c0_30, %c0_31] : memref<3x4x1xf32, #tpu.memory_space<vmem>>, vector<1x4x1xf32>
    %58 = vector.shape_cast %57 : vector<1x4x1xf32> to vector<4x1xf32>
    %59 = vector.broadcast %58 : vector<4x1xf32> to vector<4x256xf32>
    %60 = arith.addf %56, %59 : vector<4x256xf32>
    %c0_32 = arith.constant 0 : index
    %c4_33 = arith.constant 4 : index
    %c0_34 = arith.constant 0 : index
    %61 = vector.load %arg9[%c0_32, %c4_33, %c0_34] : memref<1x16x256xf32, #tpu.memory_space<vmem>>, vector<1x4x256xf32>
    %62 = vector.shape_cast %61 : vector<1x4x256xf32> to vector<4x256xf32>
    %63 = vector.shape_cast %60 : vector<4x256xf32> to vector<1x4x256xf32>
    tpu.vector_store %arg9[%c0_32, %c4_33, %c0_34], %63 {strides = array<i32>} : memref<1x16x256xf32, #tpu.memory_space<vmem>>, vector<1x4x256xf32>,
    %c0_35 = arith.constant 0 : index
    %c0_36 = arith.constant 0 : index
    %c0_37 = arith.constant 0 : index
    %64 = vector.load %arg9[%c0_35, %c0_36, %c0_37] : memref<1x16x256xf32, #tpu.memory_space<vmem>>, vector<1x8x256xf32>
    %65 = vector.shape_cast %64 : vector<1x8x256xf32> to vector<8x256xf32>
    %c1_38 = arith.constant 1 : index
    %c0_39 = arith.constant 0 : index
    %c0_40 = arith.constant 0 : index
    %66 = vector.load %arg2[%c1_38, %c0_39, %c0_40] : memref<3x16x1xf32, #tpu.memory_space<vmem>>, vector<1x8x1xf32>
    %67 = vector.shape_cast %66 : vector<1x8x1xf32> to vector<8x1xf32>
    %68 = vector.broadcast %67 : vector<8x1xf32> to vector<8x256xf32>
    %69 = arith.mulf %65, %68 : vector<8x256xf32>
    %c1_41 = arith.constant 1 : index
    %c0_42 = arith.constant 0 : index
    %c0_43 = arith.constant 0 : index
    %70 = vector.load %arg3[%c1_41, %c0_42, %c0_43] : memref<3x16x1xf32, #tpu.memory_space<vmem>>, vector<1x8x1xf32>
    %71 = vector.shape_cast %70 : vector<1x8x1xf32> to vector<8x1xf32>
    %72 = vector.broadcast %71 : vector<8x1xf32> to vector<8x256xf32>
    %73 = arith.addf %69, %72 : vector<8x256xf32>
    %cst_44 = arith.constant 0.000000e+00 : f32
    %74 = vector.broadcast %cst_44 : f32 to vector<8x256xf32>
    %75 = arith.maximumf %73, %74 : vector<8x256xf32>
    %c17_i32_45 = arith.constant 17 : i32
    %76 = tpu.dynamic_rotate %75 by %c17_i32_45 dim 1 : vector<8x256xf32>, i32 -> vector<8x256xf32>
    %77 = vector.broadcast %9 : vector<1x256xf32> to vector<8x256xf32>
    %78 = arith.mulf %76, %77 : vector<8x256xf32>
    %c16_i32_46 = arith.constant 16 : i32
    %79 = tpu.dynamic_rotate %75 by %c16_i32_46 dim 1 : vector<8x256xf32>, i32 -> vector<8x256xf32>
    %80 = vector.broadcast %10 : vector<1x256xf32> to vector<8x256xf32>
    %81 = arith.mulf %79, %80 : vector<8x256xf32>
    %c15_i32_47 = arith.constant 15 : i32
    %82 = tpu.dynamic_rotate %75 by %c15_i32_47 dim 1 : vector<8x256xf32>, i32 -> vector<8x256xf32>
    %83 = vector.broadcast %11 : vector<1x256xf32> to vector<8x256xf32>
    %84 = arith.mulf %82, %83 : vector<8x256xf32>
    %c1_i32_48 = arith.constant 1 : i32
    %85 = tpu.dynamic_rotate %75 by %c1_i32_48 dim 1 : vector<8x256xf32>, i32 -> vector<8x256xf32>
    %86 = vector.broadcast %12 : vector<1x256xf32> to vector<8x256xf32>
    %87 = arith.mulf %85, %86 : vector<8x256xf32>
    %c255_i32_49 = arith.constant 255 : i32
    %88 = tpu.dynamic_rotate %75 by %c255_i32_49 dim 1 : vector<8x256xf32>, i32 -> vector<8x256xf32>
    %89 = vector.broadcast %13 : vector<1x256xf32> to vector<8x256xf32>
    %90 = arith.mulf %88, %89 : vector<8x256xf32>
    %c241_i32_50 = arith.constant 241 : i32
    %91 = tpu.dynamic_rotate %75 by %c241_i32_50 dim 1 : vector<8x256xf32>, i32 -> vector<8x256xf32>
    %92 = vector.broadcast %14 : vector<1x256xf32> to vector<8x256xf32>
    %93 = arith.mulf %91, %92 : vector<8x256xf32>
    %c240_i32_51 = arith.constant 240 : i32
    %94 = tpu.dynamic_rotate %75 by %c240_i32_51 dim 1 : vector<8x256xf32>, i32 -> vector<8x256xf32>
    %95 = vector.broadcast %15 : vector<1x256xf32> to vector<8x256xf32>
    %96 = arith.mulf %94, %95 : vector<8x256xf32>
    %c239_i32_52 = arith.constant 239 : i32
    %97 = tpu.dynamic_rotate %75 by %c239_i32_52 dim 1 : vector<8x256xf32>, i32 -> vector<8x256xf32>
    %98 = vector.broadcast %16 : vector<1x256xf32> to vector<8x256xf32>
    %99 = arith.mulf %97, %98 : vector<8x256xf32>
    %100 = tpu.concatenate %78, %81, %84, %87, %75, %90, %93, %96, %99 in 0 : vector<8x256xf32>, vector<8x256xf32>, vector<8x256xf32>, vector<8x256xf32>, vector<8x256xf32>, vector<8x256xf32>, vector<8x256xf32>, vector<8x256xf32>, vector<8x256xf32> -> vector<72x256xf32>
    %101 = arith.truncf %100 : vector<72x256xf32> to vector<72x256xbf16>
    %c0_53 = arith.constant 0 : index
    %c0_54 = arith.constant 0 : index
    %102 = vector.load %arg7[%c0_53, %c0_54] : memref<4x72xbf16, #tpu.memory_space<vmem>>, vector<4x72xbf16>
    %cst_55 = arith.constant dense<0.000000e+00> : vector<4x256xf32>
    %103 = tpu.matmul %102, %101, %cst_55 {dimension_numbers = #tpu.dot_dimension_numbers<[1], [0], [0], [1], [0, 0, 1, 1], [], []>} : vector<4x72xbf16>, vector<72x256xbf16>, vector<4x256xf32> -> vector<4x256xf32>
    %c1_56 = arith.constant 1 : index
    %c0_57 = arith.constant 0 : index
    %c0_58 = arith.constant 0 : index
    %104 = vector.load %arg4[%c1_56, %c0_57, %c0_58] : memref<3x4x1xf32, #tpu.memory_space<vmem>>, vector<1x4x1xf32>
    %105 = vector.shape_cast %104 : vector<1x4x1xf32> to vector<4x1xf32>
    %106 = vector.broadcast %105 : vector<4x1xf32> to vector<4x256xf32>
    %107 = arith.addf %103, %106 : vector<4x256xf32>
    %c0_59 = arith.constant 0 : index
    %c8_60 = arith.constant 8 : index
    %c0_61 = arith.constant 0 : index
    %108 = vector.load %arg9[%c0_59, %c8_60, %c0_61] : memref<1x16x256xf32, #tpu.memory_space<vmem>>, vector<1x4x256xf32>
    %109 = vector.shape_cast %108 : vector<1x4x256xf32> to vector<4x256xf32>
    %110 = vector.shape_cast %107 : vector<4x256xf32> to vector<1x4x256xf32>
    tpu.vector_store %arg9[%c0_59, %c8_60, %c0_61], %110 {strides = array<i32>} : memref<1x16x256xf32, #tpu.memory_space<vmem>>, vector<1x4x256xf32>,
    %c0_62 = arith.constant 0 : index
    %c0_63 = arith.constant 0 : index
    %c0_64 = arith.constant 0 : index
    %111 = vector.load %arg9[%c0_62, %c0_63, %c0_64] : memref<1x16x256xf32, #tpu.memory_space<vmem>>, vector<1x16x256xf32>
    %112 = vector.shape_cast %111 : vector<1x16x256xf32> to vector<16x256xf32>
    %c2_65 = arith.constant 2 : index
    %c0_66 = arith.constant 0 : index
    %c0_67 = arith.constant 0 : index
    %113 = vector.load %arg2[%c2_65, %c0_66, %c0_67] : memref<3x16x1xf32, #tpu.memory_space<vmem>>, vector<1x16x1xf32>
    %114 = vector.shape_cast %113 : vector<1x16x1xf32> to vector<16x1xf32>
    %115 = vector.broadcast %114 : vector<16x1xf32> to vector<16x256xf32>
    %116 = arith.mulf %112, %115 : vector<16x256xf32>
    %c2_68 = arith.constant 2 : index
    %c0_69 = arith.constant 0 : index
    %c0_70 = arith.constant 0 : index
    %117 = vector.load %arg3[%c2_68, %c0_69, %c0_70] : memref<3x16x1xf32, #tpu.memory_space<vmem>>, vector<1x16x1xf32>
    %118 = vector.shape_cast %117 : vector<1x16x1xf32> to vector<16x1xf32>
    %119 = vector.broadcast %118 : vector<16x1xf32> to vector<16x256xf32>
    %120 = arith.addf %116, %119 : vector<16x256xf32>
    %cst_71 = arith.constant 0.000000e+00 : f32
    %121 = vector.broadcast %cst_71 : f32 to vector<16x256xf32>
    %122 = arith.maximumf %120, %121 : vector<16x256xf32>
    %c17_i32_72 = arith.constant 17 : i32
    %123 = tpu.dynamic_rotate %122 by %c17_i32_72 dim 1 : vector<16x256xf32>, i32 -> vector<16x256xf32>
    %124 = vector.broadcast %9 : vector<1x256xf32> to vector<16x256xf32>
    %125 = arith.mulf %123, %124 : vector<16x256xf32>
    %c16_i32_73 = arith.constant 16 : i32
    %126 = tpu.dynamic_rotate %122 by %c16_i32_73 dim 1 : vector<16x256xf32>, i32 -> vector<16x256xf32>
    %127 = vector.broadcast %10 : vector<1x256xf32> to vector<16x256xf32>
    %128 = arith.mulf %126, %127 : vector<16x256xf32>
    %c15_i32_74 = arith.constant 15 : i32
    %129 = tpu.dynamic_rotate %122 by %c15_i32_74 dim 1 : vector<16x256xf32>, i32 -> vector<16x256xf32>
    %130 = vector.broadcast %11 : vector<1x256xf32> to vector<16x256xf32>
    %131 = arith.mulf %129, %130 : vector<16x256xf32>
    %c1_i32_75 = arith.constant 1 : i32
    %132 = tpu.dynamic_rotate %122 by %c1_i32_75 dim 1 : vector<16x256xf32>, i32 -> vector<16x256xf32>
    %133 = vector.broadcast %12 : vector<1x256xf32> to vector<16x256xf32>
    %134 = arith.mulf %132, %133 : vector<16x256xf32>
    %c255_i32_76 = arith.constant 255 : i32
    %135 = tpu.dynamic_rotate %122 by %c255_i32_76 dim 1 : vector<16x256xf32>, i32 -> vector<16x256xf32>
    %136 = vector.broadcast %13 : vector<1x256xf32> to vector<16x256xf32>
    %137 = arith.mulf %135, %136 : vector<16x256xf32>
    %c241_i32_77 = arith.constant 241 : i32
    %138 = tpu.dynamic_rotate %122 by %c241_i32_77 dim 1 : vector<16x256xf32>, i32 -> vector<16x256xf32>
    %139 = vector.broadcast %14 : vector<1x256xf32> to vector<16x256xf32>
    %140 = arith.mulf %138, %139 : vector<16x256xf32>
    %c240_i32_78 = arith.constant 240 : i32
    %141 = tpu.dynamic_rotate %122 by %c240_i32_78 dim 1 : vector<16x256xf32>, i32 -> vector<16x256xf32>
    %142 = vector.broadcast %15 : vector<1x256xf32> to vector<16x256xf32>
    %143 = arith.mulf %141, %142 : vector<16x256xf32>
    %c239_i32_79 = arith.constant 239 : i32
    %144 = tpu.dynamic_rotate %122 by %c239_i32_79 dim 1 : vector<16x256xf32>, i32 -> vector<16x256xf32>
    %145 = vector.broadcast %16 : vector<1x256xf32> to vector<16x256xf32>
    %146 = arith.mulf %144, %145 : vector<16x256xf32>
    %147 = tpu.concatenate %125, %128, %131, %134, %122, %137, %140, %143, %146 in 0 : vector<16x256xf32>, vector<16x256xf32>, vector<16x256xf32>, vector<16x256xf32>, vector<16x256xf32>, vector<16x256xf32>, vector<16x256xf32>, vector<16x256xf32>, vector<16x256xf32> -> vector<144x256xf32>
    %148 = arith.truncf %147 : vector<144x256xf32> to vector<144x256xbf16>
    %c0_80 = arith.constant 0 : index
    %c0_81 = arith.constant 0 : index
    %149 = vector.load %arg8[%c0_80, %c0_81] : memref<4x144xbf16, #tpu.memory_space<vmem>>, vector<4x144xbf16>
    %cst_82 = arith.constant dense<0.000000e+00> : vector<4x256xf32>
    %150 = tpu.matmul %149, %148, %cst_82 {dimension_numbers = #tpu.dot_dimension_numbers<[1], [0], [0], [1], [0, 0, 1, 1], [], []>} : vector<4x144xbf16>, vector<144x256xbf16>, vector<4x256xf32> -> vector<4x256xf32>
    %c2_83 = arith.constant 2 : index
    %c0_84 = arith.constant 0 : index
    %c0_85 = arith.constant 0 : index
    %151 = vector.load %arg4[%c2_83, %c0_84, %c0_85] : memref<3x4x1xf32, #tpu.memory_space<vmem>>, vector<1x4x1xf32>
    %152 = vector.shape_cast %151 : vector<1x4x1xf32> to vector<4x1xf32>
    %153 = vector.broadcast %152 : vector<4x1xf32> to vector<4x256xf32>
    %154 = arith.addf %150, %153 : vector<4x256xf32>
    %c0_86 = arith.constant 0 : index
    %c12 = arith.constant 12 : index
    %c0_87 = arith.constant 0 : index
    %155 = vector.load %arg9[%c0_86, %c12, %c0_87] : memref<1x16x256xf32, #tpu.memory_space<vmem>>, vector<1x4x256xf32>
    %156 = vector.shape_cast %155 : vector<1x4x256xf32> to vector<4x256xf32>
    %157 = vector.shape_cast %154 : vector<4x256xf32> to vector<1x4x256xf32>
    tpu.vector_store %arg9[%c0_86, %c12, %c0_87], %157 {strides = array<i32>} : memref<1x16x256xf32, #tpu.memory_space<vmem>>, vector<1x4x256xf32>,
    return
  }
  func.func @transform_0(%arg0: i32) -> (i32, i32, i32) {
    %c0_i32 = arith.constant 0 : i32
    %c0_i32_0 = arith.constant 0 : i32
    %c0_i32_1 = arith.constant 0 : i32
    return %arg0, %c0_i32, %c0_i32_0 : i32, i32, i32
  }
  func.func @transform_1(%arg0: i32) -> (i32, i32, i32) {
    %c0_i32 = arith.constant 0 : i32
    %c0_i32_0 = arith.constant 0 : i32
    %c0_i32_1 = arith.constant 0 : i32
    %c0_i32_2 = arith.constant 0 : i32
    return %c0_i32, %c0_i32_0, %c0_i32_1 : i32, i32, i32
  }
  func.func @transform_2(%arg0: i32) -> (i32, i32, i32) {
    %c0_i32 = arith.constant 0 : i32
    %c0_i32_0 = arith.constant 0 : i32
    %c0_i32_1 = arith.constant 0 : i32
    %c0_i32_2 = arith.constant 0 : i32
    return %c0_i32, %c0_i32_0, %c0_i32_1 : i32, i32, i32
  }
  func.func @transform_3(%arg0: i32) -> (i32, i32, i32) {
    %c0_i32 = arith.constant 0 : i32
    %c0_i32_0 = arith.constant 0 : i32
    %c0_i32_1 = arith.constant 0 : i32
    %c0_i32_2 = arith.constant 0 : i32
    return %c0_i32, %c0_i32_0, %c0_i32_1 : i32, i32, i32
  }
  func.func @transform_4(%arg0: i32) -> (i32, i32) {
    %c0_i32 = arith.constant 0 : i32
    %c0_i32_0 = arith.constant 0 : i32
    %c0_i32_1 = arith.constant 0 : i32
    return %c0_i32, %c0_i32_0 : i32, i32
  }
  func.func @transform_5(%arg0: i32) -> (i32, i32) {
    %c0_i32 = arith.constant 0 : i32
    %c0_i32_0 = arith.constant 0 : i32
    %c0_i32_1 = arith.constant 0 : i32
    return %c0_i32, %c0_i32_0 : i32, i32
  }
  func.func @transform_6(%arg0: i32) -> (i32, i32) {
    %c0_i32 = arith.constant 0 : i32
    %c0_i32_0 = arith.constant 0 : i32
    %c0_i32_1 = arith.constant 0 : i32
    return %c0_i32, %c0_i32_0 : i32, i32
  }
  func.func @transform_7(%arg0: i32) -> (i32, i32) {
    %c0_i32 = arith.constant 0 : i32
    %c0_i32_0 = arith.constant 0 : i32
    %c0_i32_1 = arith.constant 0 : i32
    return %c0_i32, %c0_i32_0 : i32, i32
  }
  func.func @transform_8(%arg0: i32) -> (i32, i32, i32) {
    %c0_i32 = arith.constant 0 : i32
    %c0_i32_0 = arith.constant 0 : i32
    %c0_i32_1 = arith.constant 0 : i32
    return %arg0, %c0_i32, %c0_i32_0 : i32, i32, i32
  }
}

</mosaic_0001>

<llo_original>
// kernel: tpu_custom_call.1
$region0: #{tpu_custom_call.1}
  #allocation0 [shape = 'u32[]', space=smem, size = 0x4, offset = 0x4, fixed_abs, tag = 'smem constant byte address 0x4 - core index']
  #allocation1 [shape = 'u32[72,128]{1,0:T(1,128)}', space=vmem, size = 0x9000, scoped, tag = 'internal scratch']
  %s0 = inlined_call_operand.vmem [shape: f32[2,4,256], index: 0, kind: input, shape index: {}]
  %s1 = inlined_call_operand.vmem [shape: f32[3,16,1], index: 1, kind: input, shape index: {}]
  %s2 = inlined_call_operand.vmem [shape: f32[3,16,1], index: 2, kind: input, shape index: {}]
  %s3 = inlined_call_operand.vmem [shape: f32[3,4,1], index: 3, kind: input, shape index: {}]
  %s4 = inlined_call_operand.vmem [shape: f32[9,256], index: 4, kind: input, shape index: {}]
  %s5 = inlined_call_operand.vmem [shape: bf16[4,72], index: 5, kind: input, shape index: {}]
  %s6 = inlined_call_operand.vmem [shape: bf16[4,72], index: 6, kind: input, shape index: {}]
  %s7 = inlined_call_operand.vmem [shape: bf16[4,144], index: 7, kind: input, shape index: {}]
  %s8 = inlined_call_operand.hbm [shape: f32[2,16,256], index: 8, kind: output, shape index: {}]
  %s9 = sld [smem:[#allocation0]]
  $region65: #{tpu_custom_call.1} parent=0
    _
  %s11 = ssub.s32 1, %s9
  %s12 = scalar_select 0, %s11, %s9
  $region1: #{tpu_custom_call.1} parent=0
    #allocation2 [shape = 'u8[32768]{0}', space=vmem, size = 0x8000, scoped, tag = 'output window, operand 0']
    #allocation3 [shape = 's32[2]{0}', space=sflag, size = 0x8, scoped, tag = 'scoped memory for tpu_custom_call.1']
    %13 = vsyncpa [#allocation3], 0
    %s14 = scalar_lea.sflag [#allocation3], 1
    %15 = vsyncpa %s14, 0
    loop: start=0, step=1, limit=4
    $region2: #{tpu_custom_call.1} parent=1 // loop_pre_header
      _
    $region3: #{tpu_custom_call.1} parent=1 // loop_header
      %s17 = sphi 0, %s21
      %p18 = scmp.ge.s32.totalorder %s17, 4
      %s27 = sphi 0, %s29
      %s30 = sphi 0, %s27
      %s31 = sphi 0, %s30
      %s47 = sphi 0, %s31
      %s51 = sphi 0, %s51
      %s53 = sphi 0, %s51
      %s54 = sphi 0, %s53
      %s68 = sphi 0, %s54
      %s72 = sphi 0, %s72
      %s74 = sphi 0, %s72
      %s75 = sphi 0, %s74
      %s89 = sphi 0, %s75
      %s93 = sphi 0, %s93
      %s95 = sphi 0, %s93
      %s96 = sphi 0, %s95
      %s110 = sphi 0, %s96
      %s114 = sphi 0, %s114
      %s116 = sphi 0, %s114
      %s117 = sphi 0, %s116
      %s131 = sphi 0, %s117
      %s135 = sphi 0, %s135
      %s137 = sphi 0, %s135
      %s138 = sphi 0, %s137
      %s152 = sphi 0, %s138
      %s156 = sphi 0, %s156
      %s158 = sphi 0, %s156
      %s159 = sphi 0, %s158
      %s173 = sphi 0, %s159
      %s177 = sphi 0, %s177
      %s179 = sphi 0, %s177
      %s180 = sphi 0, %s179
      %s194 = sphi 0, %s180
      %s200 = sphi 0, %s202
      %s203 = sphi 0, %s200
      %s204 = sphi 0, %s203
      %s220 = sphi 0, %s204
    $region4: #{tpu_custom_call.1} parent=1 // loop_header_branch
      %20 = sbr.rel (%p18) target = $region8
    $region5: #{tpu_custom_call.1} parent=1 // loop_body
      %s22 = ssub.s32 %s17, 1
      %s23 = ssub.s32 %s17, 2
      %s24 = sadd.s32 %s17, 1
      %s25 = ssub.s32 %s17, %s24
      %p26 = scmp.eq.s32.totalorder %s25, 0
      %s28 = sadd.s32 %s27, 1
      %s29 = scalar_select %p26, %s27, %s28
      %p32 = pneg %p26
      %p33 = scmp.eq.s32.totalorder %s17, 1
      %p34 = por %p32, %p33
      %p35 = scmp.ne.s32.totalorder %s27, %s30
      %p36 = scmp.eq.s32.totalorder %s17, 0
      %p37 = por %p35, %p36
      %p38 = scmp.ne.s32.totalorder %s27, %s30
      %p39 = scmp.eq.s32.totalorder %s22, 1
      %p40 = por %p38, %p39
      %p41 = scmp.ne.s32.totalorder %s30, %s31
      %p42 = scmp.eq.s32.totalorder %s22, 0
      %p43 = por %p41, %p42
      %p44 = scmp.ne.s32.totalorder %s30, %s31
      %p45 = scmp.eq.s32.totalorder %s23, 1
      %p46 = por %p44, %p45
      %p48 = scmp.ne.s32.totalorder %s31, %s47
      %p49 = scmp.eq.s32.totalorder %s23, 0
      %p50 = por %p48, %p49
      %s52 = sadd.s32 %s51, 1
      %p55 = scmp.eq.s32.totalorder %s17, 1
      %p56 = scmp.ne.s32.totalorder %s51, %s53
      %p57 = scmp.eq.s32.totalorder %s17, 0
      %p58 = por %p56, %p57
      %p59 = scmp.ne.s32.totalorder %s51, %s53
      %p60 = scmp.eq.s32.totalorder %s22, 1
      %p61 = por %p59, %p60
      %p62 = scmp.ne.s32.totalorder %s53, %s54
      %p63 = scmp.eq.s32.totalorder %s22, 0
      %p64 = por %p62, %p63
      %p65 = scmp.ne.s32.totalorder %s53, %s54
      %p66 = scmp.eq.s32.totalorder %s23, 1
      %p67 = por %p65, %p66
      %p69 = scmp.ne.s32.totalorder %s54, %s68
      %p70 = scmp.eq.s32.totalorder %s23, 0
      %p71 = por %p69, %p70
      %s73 = sadd.s32 %s72, 1
      %p76 = scmp.eq.s32.totalorder %s17, 1
      %p77 = scmp.ne.s32.totalorder %s72, %s74
      %p78 = scmp.eq.s32.totalorder %s17, 0
      %p79 = por %p77, %p78
      %p80 = scmp.ne.s32.totalorder %s72, %s74
      %p81 = scmp.eq.s32.totalorder %s22, 1
      %p82 = por %p80, %p81
      %p83 = scmp.ne.s32.totalorder %s74, %s75
      %p84 = scmp.eq.s32.totalorder %s22, 0
      %p85 = por %p83, %p84
      %p86 = scmp.ne.s32.totalorder %s74, %s75
      %p87 = scmp.eq.s32.totalorder %s23, 1
      %p88 = por %p86, %p87
      %p90 = scmp.ne.s32.totalorder %s75, %s89
      %p91 = scmp.eq.s32.totalorder %s23, 0
      %p92 = por %p90, %p91
      %s94 = sadd.s32 %s93, 1
      %p97 = scmp.eq.s32.totalorder %s17, 1
      %p98 = scmp.ne.s32.totalorder %s93, %s95
      %p99 = scmp.eq.s32.totalorder %s17, 0
      %p100 = por %p98, %p99
      %p101 = scmp.ne.s32.totalorder %s93, %s95
      %p102 = scmp.eq.s32.totalorder %s22, 1
      %p103 = por %p101, %p102
      %p104 = scmp.ne.s32.totalorder %s95, %s96
      %p105 = scmp.eq.s32.totalorder %s22, 0
      %p106 = por %p104, %p105
      %p107 = scmp.ne.s32.totalorder %s95, %s96
      %p108 = scmp.eq.s32.totalorder %s23, 1
      %p109 = por %p107, %p108
      %p111 = scmp.ne.s32.totalorder %s96, %s110
      %p112 = scmp.eq.s32.totalorder %s23, 0
      %p113 = por %p111, %p112
      %s115 = sadd.s32 %s114, 1
      %p118 = scmp.eq.s32.totalorder %s17, 1
      %p119 = scmp.ne.s32.totalorder %s114, %s116
      %p120 = scmp.eq.s32.totalorder %s17, 0
      %p121 = por %p119, %p120
      %p122 = scmp.ne.s32.totalorder %s114, %s116
      %p123 = scmp.eq.s32.totalorder %s22, 1
      %p124 = por %p122, %p123
      %p125 = scmp.ne.s32.totalorder %s116, %s117
      %p126 = scmp.eq.s32.totalorder %s22, 0
      %p127 = por %p125, %p126
      %p128 = scmp.ne.s32.totalorder %s116, %s117
      %p129 = scmp.eq.s32.totalorder %s23, 1
      %p130 = por %p128, %p129
      %p132 = scmp.ne.s32.totalorder %s117, %s131
      %p133 = scmp.eq.s32.totalorder %s23, 0
      %p134 = por %p132, %p133
      %s136 = sadd.s32 %s135, 1
      %p139 = scmp.eq.s32.totalorder %s17, 1
      %p140 = scmp.ne.s32.totalorder %s135, %s137
      %p141 = scmp.eq.s32.totalorder %s17, 0
      %p142 = por %p140, %p141
      %p143 = scmp.ne.s32.totalorder %s135, %s137
      %p144 = scmp.eq.s32.totalorder %s22, 1
      %p145 = por %p143, %p144
      %p146 = scmp.ne.s32.totalorder %s137, %s138
      %p147 = scmp.eq.s32.totalorder %s22, 0
      %p148 = por %p146, %p147
      %p149 = scmp.ne.s32.totalorder %s137, %s138
      %p150 = scmp.eq.s32.totalorder %s23, 1
      %p151 = por %p149, %p150
      %p153 = scmp.ne.s32.totalorder %s138, %s152
      %p154 = scmp.eq.s32.totalorder %s23, 0
      %p155 = por %p153, %p154
      %s157 = sadd.s32 %s156, 1
      %p160 = scmp.eq.s32.totalorder %s17, 1
      %p161 = scmp.ne.s32.totalorder %s156, %s158
      %p162 = scmp.eq.s32.totalorder %s17, 0
      %p163 = por %p161, %p162
      %p164 = scmp.ne.s32.totalorder %s156, %s158
      %p165 = scmp.eq.s32.totalorder %s22, 1
      %p166 = por %p164, %p165
      %p167 = scmp.ne.s32.totalorder %s158, %s159
      %p168 = scmp.eq.s32.totalorder %s22, 0
      %p169 = por %p167, %p168
      %p170 = scmp.ne.s32.totalorder %s158, %s159
      %p171 = scmp.eq.s32.totalorder %s23, 1
      %p172 = por %p170, %p171
      %p174 = scmp.ne.s32.totalorder %s159, %s173
      %p175 = scmp.eq.s32.totalorder %s23, 0
      %p176 = por %p174, %p175
      %s178 = sadd.s32 %s177, 1
      %p181 = scmp.eq.s32.totalorder %s17, 1
      %p182 = scmp.ne.s32.totalorder %s177, %s179
      %p183 = scmp.eq.s32.totalorder %s17, 0
      %p184 = por %p182, %p183
      %p185 = scmp.ne.s32.totalorder %s177, %s179
      %p186 = scmp.eq.s32.totalorder %s22, 1
      %p187 = por %p185, %p186
      %p188 = scmp.ne.s32.totalorder %s179, %s180
      %p189 = scmp.eq.s32.totalorder %s22, 0
      %p190 = por %p188, %p189
      %p191 = scmp.ne.s32.totalorder %s179, %s180
      %p192 = scmp.eq.s32.totalorder %s23, 1
      %p193 = por %p191, %p192
      %p195 = scmp.ne.s32.totalorder %s180, %s194
      %p196 = scmp.eq.s32.totalorder %s23, 0
      %p197 = por %p195, %p196
      %s198 = ssub.s32 %s17, %s24
      %p199 = scmp.eq.s32.totalorder %s198, 0
      %s201 = sadd.s32 %s200, 1
      %s202 = scalar_select %p199, %s200, %s201
      %p205 = pneg %p199
      %p206 = scmp.eq.s32.totalorder %s17, 1
      %p207 = por %p205, %p206
      %p208 = scmp.ne.s32.totalorder %s200, %s203
      %p209 = scmp.eq.s32.totalorder %s17, 0
      %p210 = por %p208, %p209
      %p211 = scmp.ne.s32.totalorder %s200, %s203
      %p212 = scmp.eq.s32.totalorder %s22, 1
      %p213 = por %p211, %p212
      %p214 = scmp.ne.s32.totalorder %s203, %s204
      %p215 = scmp.eq.s32.totalorder %s22, 0
      %p216 = por %p214, %p215
      %p217 = scmp.ne.s32.totalorder %s203, %s204
      %p218 = scmp.eq.s32.totalorder %s23, 1
      %p219 = por %p217, %p218
      %p221 = scmp.ne.s32.totalorder %s204, %s220
      %p222 = scmp.eq.s32.totalorder %s23, 0
      %p223 = por %p221, %p222
      %p224 = scmp.le.s32.totalorder 1, %s17
      %p225 = scmp.lt.s32.totalorder %s17, 3
      %p226 = pnand %p224, %p225
      %p227 = pneg %p226
      // Predicated region
      $region9: #{tpu_custom_call.1} parent=5 // pred_check
        _
      $region10: #{tpu_custom_call.1} parent=5 // pred_check_branch
        %229 = sbr.rel (%p226) target = $region12
      $region11: #{tpu_custom_call.1} parent=5 // pred_region
        %s230 = ssub.s32 %s17, 1
        // Predicated region
        $region13: #{tpu_custom_call.1} parent=11 // pred_check
          %p231 = pneg %p64
        $region14: #{tpu_custom_call.1} parent=11 // pred_check_branch
          %233 = sbr.rel (%p231) target = $region16
        $region15: #{tpu_custom_call.1} parent=11 // pred_region
          _
        $region16: #{tpu_custom_call.1} parent=11 // pred_fallthru
          _
        // Predicated region
        $region17: #{tpu_custom_call.1} parent=11 // pred_check
          %p234 = pneg %p85
        $region18: #{tpu_custom_call.1} parent=11 // pred_check_branch
          %236 = sbr.rel (%p234) target = $region20
        $region19: #{tpu_custom_call.1} parent=11 // pred_region
          _
        $region20: #{tpu_custom_call.1} parent=11 // pred_fallthru
          _
        // Predicated region
        $region21: #{tpu_custom_call.1} parent=11 // pred_check
          %p237 = pneg %p106
        $region22: #{tpu_custom_call.1} parent=11 // pred_check_branch
          %239 = sbr.rel (%p237) target = $region24
        $region23: #{tpu_custom_call.1} parent=11 // pred_region
          _
        $region24: #{tpu_custom_call.1} parent=11 // pred_fallthru
          _
        // Predicated region
        $region25: #{tpu_custom_call.1} parent=11 // pred_check
          %p240 = pneg %p127
        $region26: #{tpu_custom_call.1} parent=11 // pred_check_branch
          %242 = sbr.rel (%p240) target = $region28
        $region27: #{tpu_custom_call.1} parent=11 // pred_region
          _
        $region28: #{tpu_custom_call.1} parent=11 // pred_fallthru
          _
        // Predicated region
        $region29: #{tpu_custom_call.1} parent=11 // pred_check
          %p243 = pneg %p148
        $region30: #{tpu_custom_call.1} parent=11 // pred_check_branch
          %245 = sbr.rel (%p243) target = $region32
        $region31: #{tpu_custom_call.1} parent=11 // pred_region
          _
        $region32: #{tpu_custom_call.1} parent=11 // pred_fallthru
          _
        // Predicated region
        $region33: #{tpu_custom_call.1} parent=11 // pred_check
          %p246 = pneg %p169
        $region34: #{tpu_custom_call.1} parent=11 // pred_check_branch
          %248 = sbr.rel (%p246) target = $region36
        $region35: #{tpu_custom_call.1} parent=11 // pred_region
          _
        $region36: #{tpu_custom_call.1} parent=11 // pred_fallthru
          _
        // Predicated region
        $region37: #{tpu_custom_call.1} parent=11 // pred_check
          %p249 = pneg %p190
        $region38: #{tpu_custom_call.1} parent=11 // pred_check_branch
          %251 = sbr.rel (%p249) target = $region40
        $region39: #{tpu_custom_call.1} parent=11 // pred_region
          _
        $region40: #{tpu_custom_call.1} parent=11 // pred_fallthru
          _
      $region12: #{tpu_custom_call.1} parent=5 // pred_fallthru
        _
      %p252 = scmp.lt.s32.totalorder %s17, 2
      // Predicated region
      $region41: #{tpu_custom_call.1} parent=5 // pred_check
        %p253 = pneg %p252
      $region42: #{tpu_custom_call.1} parent=5 // pred_check_branch
        %255 = sbr.rel (%p253) target = $region44
      $region43: #{tpu_custom_call.1} parent=5 // pred_region
        // Predicated region
        $region45: #{tpu_custom_call.1} parent=43 // pred_check
          %p256 = pneg %p37
        $region46: #{tpu_custom_call.1} parent=43 // pred_check_branch
          %258 = sbr.rel (%p256) target = $region48
        $region47: #{tpu_custom_call.1} parent=43 // pred_region
          %p259 = scmp.lt.s32.totalorder %s17, 1
          %s260 = scalar_select %p259, %s17, 1
          %s261 = smul.addr %s260, 2
          %s262 = smul.addr %s261, 4
          %s263 = scalar_lea.vmem %s0, %s262
        $region48: #{tpu_custom_call.1} parent=43 // pred_fallthru
          _
      $region44: #{tpu_custom_call.1} parent=5 // pred_fallthru
        _
      %p264 = scmp.le.s32.totalorder 1, %s17
      %p265 = scmp.lt.s32.totalorder %s17, 3
      %p266 = pnand %p264, %p265
      %p267 = pneg %p266
      // Predicated region
      $region49: #{tpu_custom_call.1} parent=5 // pred_check
        _
      $region50: #{tpu_custom_call.1} parent=5 // pred_check_branch
        %269 = sbr.rel (%p266) target = $region52
      $region51: #{tpu_custom_call.1} parent=5 // pred_region
        %s270 = ssub.s32 %s17, 1
        %p271 = scmp.lt.s32.totalorder %s22, 1
        %s272 = scalar_select %p271, %s22, 1
        %s273 = smul.addr %s272, 2
        %s274 = smul.addr %s273, 4
        %s275 = scalar_lea.vmem %s0, %s274
        %p276 = pneg %p43
        %p277 = pneg %p40
        %p278 = pneg %p64
        %p279 = pneg %p61
        %p280 = pneg %p85
        %p281 = pneg %p82
        %p282 = pneg %p106
        %p283 = pneg %p103
        %p284 = pneg %p127
        %p285 = pneg %p124
        %p286 = pneg %p148
        %p287 = pneg %p145
        %p288 = pneg %p169
        %p289 = pneg %p166
        %p290 = pneg %p190
        %p291 = pneg %p187
        %p292 = pneg %p216
        %p293 = pneg %p213
        %s294 = sand.u32 %s203, 1
        %s295 = scalar_lea.sflag [#allocation3], %s294
        %s296 = sand.u32 %s203, 1
        %s297 = smul.addr %s296, 32
        %s298 = scalar_lea.vmem [#allocation2], %s297
        %p299 = scmp.lt.s32.totalorder %s22, 1
        %s300 = scalar_select %p299, %s22, 1
        %s301 = smul.addr %s300, 2
        %s302 = smul.addr %s301, 4
        %s303 = scalar_lea.vmem %s0, %s302
        %v305 = vld [vmem:[%s303] sm:$0xff]
        %307 = vst [vmem:[#allocation1] ss:$2 sm:$0xff] %v305
        %v308 = vld.sshfl [vmem:[#allocation1] sm:$0xff pattern:$0x75316420]
        %v309 = vld.sshfl [vmem:[#allocation1 + $0x8] sm:$0xff pattern:$0x75316420]
        %312 = vst [vmem:[%s298] sm:$0xf] %v308
        %313 = vst [vmem:[%s298 + $0x8] sm:$0xf] %v309
        %314 = vst [vmem:[%s298] sm:$0xf0] 0.0
        %315 = vst [vmem:[%s298 + $0x8] sm:$0xf0] 0.0
        %316 = vst [vmem:[%s298 + $0x10] sm:$0xff] 0.0
        %317 = vst [vmem:[%s298 + $0x18] sm:$0xff] 0.0
        %v318 = vld [vmem:[%s4] ss:$8 sm:$0x3]
        %s319 = scalar_lea.vmem %s4, 1
        %v320 = vld [vmem:[%s319] ss:$8 sm:$0x3]
        %s321 = scalar_lea.vmem %s4, 2
        %v322 = vld [vmem:[%s321] ss:$8 sm:$0x3]
        %s323 = scalar_lea.vmem %s4, 3
        %v324 = vld [vmem:[%s323] ss:$8 sm:$0x3]
        %s325 = scalar_lea.vmem %s4, 5
        %v326 = vld [vmem:[%s325] ss:$8 sm:$0x3]
        %s327 = scalar_lea.vmem %s4, 6
        %v328 = vld [vmem:[%s327] ss:$8 sm:$0x3]
        %s329 = scalar_lea.vmem %s4, 7
        %v330 = vld [vmem:[%s329] ss:$8 sm:$0x3]
        %s331 = scalar_lea.vmem %s4, 16
        %v332 = vld [vmem:[%s331] ss:$8 sm:$0x3]
        %v333 = vld [vmem:[%s298] sm:$0xff]
        %v334 = vld [vmem:[%s298 + $0x8] sm:$0xff]
        %v335 = vld [vmem:[%s1] sm:$0xff]
        %337 = vset.pattern.permute.xlu0 0
        %338 = vperm.xlu0 %337, %v335
        %v339 = vpop.permute.xlu0 %338
        %v341 = vmul.f32 %v333, %v339
        %v342 = vmul.f32 %v334, %v339
        %v343 = vld [vmem:[%s2] sm:$0xff]
        %345 = vset.pattern.permute.xlu0 0
        %346 = vperm.xlu0 %345, %v343
        %v347 = vpop.permute.xlu0 %346
        %v349 = vadd.f32 %v341, %v347
        %v350 = vadd.f32 %v342, %v347
        %v351 = vmax.f32 %v349, 0.0
        %v352 = vmax.f32 %v350, 0.0
        %353 = vrot.lane.b32.xlu0 %v351, 17
        %v354 = vpop.permute.xlu0 %353
        %355 = vrot.lane.b32.xlu0 %v352, 17
        %v356 = vpop.permute.xlu0 %355
        %v357 = vlaneseq
        %v358 = vand.u32 %v357, 127
        %vm359 = vcmp.lt.s32.totalorder %v358, 17
        %v360 = vsel %vm359, %v354, %v356
        %v361 = vsel %vm359, %v356, %v354
        %v363 = vperm.slane %v318, 0
        %v364 = vperm.slane %v318, 1
        %v367 = vmul.f32 %v361, %v363
        %v368 = vmul.f32 %v360, %v364
        %369 = vrot.lane.b32.xlu0 %v351, 16
        %v370 = vpop.permute.xlu0 %369
        %371 = vrot.lane.b32.xlu0 %v352, 16
        %v372 = vpop.permute.xlu0 %371
        %vm373 = vcmp.lt.s32.totalorder %v358, 16
        %v374 = vsel %vm373, %v370, %v372
        %v375 = vsel %vm373, %v372, %v370
        %v377 = vperm.slane %v320, 0
        %v378 = vperm.slane %v320, 1
        %v381 = vmul.f32 %v375, %v377
        %v382 = vmul.f32 %v374, %v378
        %383 = vrot.lane.b32.xlu0 %v351, 15
        %v384 = vpop.permute.xlu0 %383
        %385 = vrot.lane.b32.xlu0 %v352, 15
        %v386 = vpop.permute.xlu0 %385
        %vm387 = vcmp.lt.s32.totalorder %v358, 15
        %v388 = vsel %vm387, %v384, %v386
        %v389 = vsel %vm387, %v386, %v384
        %v391 = vperm.slane %v322, 0
        %v392 = vperm.slane %v322, 1
        %v395 = vmul.f32 %v389, %v391
        %v396 = vmul.f32 %v388, %v392
        %397 = vrot.lane.b32.xlu0 %v351, 1
        %v398 = vpop.permute.xlu0 %397
        %399 = vrot.lane.b32.xlu0 %v352, 1
        %v400 = vpop.permute.xlu0 %399
        %vm401 = vcmp.lt.s32.totalorder %v358, 1
        %v402 = vsel %vm401, %v398, %v400
        %v403 = vsel %vm401, %v400, %v398
        %v405 = vperm.slane %v324, 0
        %v406 = vperm.slane %v324, 1
        %v409 = vmul.f32 %v403, %v405
        %v410 = vmul.f32 %v402, %v406
        %411 = vrot.lane.b32.xlu0 %v351, 127
        %v412 = vpop.permute.xlu0 %411
        %413 = vrot.lane.b32.xlu0 %v352, 127
        %v414 = vpop.permute.xlu0 %413
        %vm415 = vcmp.lt.s32.totalorder %v358, 127
        %v416 = vsel %vm415, %v412, %v414
        %v417 = vsel %vm415, %v414, %v412
        %v419 = vperm.slane %v326, 0
        %v420 = vperm.slane %v326, 1
        %v423 = vmul.f32 %v416, %v419
        %v424 = vmul.f32 %v417, %v420
        %425 = vrot.lane.b32.xlu0 %v351, 113
        %v426 = vpop.permute.xlu0 %425
        %427 = vrot.lane.b32.xlu0 %v352, 113
        %v428 = vpop.permute.xlu0 %427
        %vm429 = vcmp.lt.s32.totalorder %v358, 113
        %v430 = vsel %vm429, %v426, %v428
        %v431 = vsel %vm429, %v428, %v426
        %v433 = vperm.slane %v328, 0
        %v434 = vperm.slane %v328, 1
        %v437 = vmul.f32 %v430, %v433
        %v438 = vmul.f32 %v431, %v434
        %439 = vrot.lane.b32.xlu0 %v351, 112
        %v440 = vpop.permute.xlu0 %439
        %441 = vrot.lane.b32.xlu0 %v352, 112
        %v442 = vpop.permute.xlu0 %441
        %vm443 = vcmp.lt.s32.totalorder %v358, 112
        %v444 = vsel %vm443, %v440, %v442
        %v445 = vsel %vm443, %v442, %v440
        %v447 = vperm.slane %v330, 0
        %v448 = vperm.slane %v330, 1
        %v451 = vmul.f32 %v444, %v447
        %v452 = vmul.f32 %v445, %v448
        %453 = vrot.lane.b32.xlu0 %v351, 111
        %v454 = vpop.permute.xlu0 %453
        %455 = vrot.lane.b32.xlu0 %v352, 111
        %v456 = vpop.permute.xlu0 %455
        %vm457 = vcmp.lt.s32.totalorder %v358, 111
        %v458 = vsel %vm457, %v454, %v456
        %v459 = vsel %vm457, %v456, %v454
        %v461 = vperm.slane %v332, 0
        %v462 = vperm.slane %v332, 1
        %v465 = vmul.f32 %v458, %v461
        %v466 = vmul.f32 %v459, %v462
        %v467 = vpack.c.bf16 %v381, %v367
        %v468 = vpack.c.bf16 %v382, %v368
        %v469 = vpack.c.bf16 %v409, %v395
        %v470 = vpack.c.bf16 %v410, %v396
        %v471 = vpack.c.bf16 %v423, %v351
        %v472 = vpack.c.bf16 %v424, %v352
        %v473 = vpack.c.bf16 %v451, %v437
        %v474 = vpack.c.bf16 %v452, %v438
        %v475 = vpack.c.bf16 %v465, %v465
        %v476 = vpack.c.bf16 %v466, %v466
        %v477 = vld [vmem:[%s5] sm:$0x3]
        %v478 = vld [vmem:[%s3] sm:$0xf]
        %480 = vset.pattern.permute.xlu0 0
        %481 = vperm.xlu0 %480, %v478
        %v482 = vpop.permute.xlu0 %481
        %vm484 = vcmask 588800
        %v486 = vsel %vm484, %v477, 0
        %vm488 = vcmask 1043456
        %v490 = vsel %vm488, %v475, 0
        %v493 = vsel %vm488, %v476, 0
        %495 = vmatpush.bf16.msra.mxu0 0
        %496 = vmatpush.bf16.msra.mxu0 0
        %497 = vmatpush.bf16.msra.mxu0 0
        %498 = vmatpush.bf16.msra.mxu0 %v490
        %499 = vmatpush.bf16.msra.mxu0 %v473
        %500 = vmatpush.bf16.msra.mxu0 %v471
        %501 = vmatpush.bf16.msra.mxu0 %v469
        %502 = vmatpush.bf16.msra.mxu0 %v467
        %503 = vmatmul.bf16.gmra.mxu0 %v486
        %v504 = vpop.f32.mrf.mxu0
        %v505 = vadd.f32 %v482, %v504
        %v506 = vpop.f32.mrf.mxu0
        %507 = vdwg.mxu0
        %508 = vmatpush.bf16.msra.mxu0 0
        %509 = vmatpush.bf16.msra.mxu0 0
        %510 = vmatpush.bf16.msra.mxu0 0
        %511 = vmatpush.bf16.msra.mxu0 %v493
        %512 = vmatpush.bf16.msra.mxu0 %v474
        %513 = vmatpush.bf16.msra.mxu0 %v472
        %514 = vmatpush.bf16.msra.mxu0 %v470
        %515 = vmatpush.bf16.msra.mxu0 %v468
        %516 = vmatmul.bf16.gmra.mxu0 %v486
        %v517 = vpop.f32.mrf.mxu0
        %v518 = vadd.f32 %v482, %v517
        %v519 = vpop.f32.mrf.mxu0
        %520 = vdwg.mxu0
        %v523 = vrot.slane %v505, 4
        %v524 = vrot.slane %v518, 4
        %527 = vst [vmem:[%s298] sm:$0xf0] %v523
        %528 = vst [vmem:[%s298 + $0x8] sm:$0xf0] %v524
        %v529 = vld [vmem:[%s298] sm:$0xff]
        %v530 = vld [vmem:[%s298 + $0x8] sm:$0xff]
        %s531 = scalar_lea.vmem %s1, 16
        %v532 = vld [vmem:[%s531] sm:$0xff]
        %534 = vset.pattern.permute.xlu0 0
        %535 = vperm.xlu0 %534, %v532
        %v536 = vpop.permute.xlu0 %535
        %v538 = vmul.f32 %v529, %v536
        %v539 = vmul.f32 %v530, %v536
        %s540 = scalar_lea.vmem %s2, 16
        %v541 = vld [vmem:[%s540] sm:$0xff]
        %543 = vset.pattern.permute.xlu0 0
        %544 = vperm.xlu0 %543, %v541
        %v545 = vpop.permute.xlu0 %544
        %v547 = vadd.f32 %v538, %v545
        %v548 = vadd.f32 %v539, %v545
        %v549 = vmax.f32 %v547, 0.0
        %v550 = vmax.f32 %v548, 0.0
        %551 = vrot.lane.b32.xlu0 %v549, 17
        %v552 = vpop.permute.xlu0 %551
        %553 = vrot.lane.b32.xlu0 %v550, 17
        %v554 = vpop.permute.xlu0 %553
        %v555 = vsel %vm359, %v552, %v554
        %v556 = vsel %vm359, %v554, %v552
        %v557 = vmul.f32 %v556, %v363
        %v558 = vmul.f32 %v555, %v364
        %559 = vrot.lane.b32.xlu0 %v549, 16
        %v560 = vpop.permute.xlu0 %559
        %561 = vrot.lane.b32.xlu0 %v550, 16
        %v562 = vpop.permute.xlu0 %561
        %v563 = vsel %vm373, %v560, %v562
        %v564 = vsel %vm373, %v562, %v560
        %v565 = vmul.f32 %v564, %v377
        %v566 = vmul.f32 %v563, %v378
        %567 = vrot.lane.b32.xlu0 %v549, 15
        %v568 = vpop.permute.xlu0 %567
        %569 = vrot.lane.b32.xlu0 %v550, 15
        %v570 = vpop.permute.xlu0 %569
        %v571 = vsel %vm387, %v568, %v570
        %v572 = vsel %vm387, %v570, %v568
        %v573 = vmul.f32 %v572, %v391
        %v574 = vmul.f32 %v571, %v392
        %575 = vrot.lane.b32.xlu0 %v549, 1
        %v576 = vpop.permute.xlu0 %575
        %577 = vrot.lane.b32.xlu0 %v550, 1
        %v578 = vpop.permute.xlu0 %577
        %v579 = vsel %vm401, %v576, %v578
        %v580 = vsel %vm401, %v578, %v576
        %v581 = vmul.f32 %v580, %v405
        %v582 = vmul.f32 %v579, %v406
        %583 = vrot.lane.b32.xlu0 %v549, 127
        %v584 = vpop.permute.xlu0 %583
        %585 = vrot.lane.b32.xlu0 %v550, 127
        %v586 = vpop.permute.xlu0 %585
        %v587 = vsel %vm415, %v584, %v586
        %v588 = vsel %vm415, %v586, %v584
        %v589 = vmul.f32 %v587, %v419
        %v590 = vmul.f32 %v588, %v420
        %591 = vrot.lane.b32.xlu0 %v549, 113
        %v592 = vpop.permute.xlu0 %591
        %593 = vrot.lane.b32.xlu0 %v550, 113
        %v594 = vpop.permute.xlu0 %593
        %v595 = vsel %vm429, %v592, %v594
        %v596 = vsel %vm429, %v594, %v592
        %v597 = vmul.f32 %v595, %v433
        %v598 = vmul.f32 %v596, %v434
        %599 = vrot.lane.b32.xlu0 %v549, 112
        %v600 = vpop.permute.xlu0 %599
        %601 = vrot.lane.b32.xlu0 %v550, 112
        %v602 = vpop.permute.xlu0 %601
        %v603 = vsel %vm443, %v600, %v602
        %v604 = vsel %vm443, %v602, %v600
        %v605 = vmul.f32 %v603, %v447
        %v606 = vmul.f32 %v604, %v448
        %607 = vrot.lane.b32.xlu0 %v549, 111
        %v608 = vpop.permute.xlu0 %607
        %609 = vrot.lane.b32.xlu0 %v550, 111
        %v610 = vpop.permute.xlu0 %609
        %v611 = vsel %vm457, %v608, %v610
        %v612 = vsel %vm457, %v610, %v608
        %v613 = vmul.f32 %v611, %v461
        %v614 = vmul.f32 %v612, %v462
        %v615 = vpack.c.bf16 %v565, %v557
        %v616 = vpack.c.bf16 %v566, %v558
        %v617 = vpack.c.bf16 %v581, %v573
        %v618 = vpack.c.bf16 %v582, %v574
        %v619 = vpack.c.bf16 %v589, %v549
        %v620 = vpack.c.bf16 %v590, %v550
        %v621 = vpack.c.bf16 %v605, %v597
        %v622 = vpack.c.bf16 %v606, %v598
        %v623 = vpack.c.bf16 %v613, %v613
        %v624 = vpack.c.bf16 %v614, %v614
        %v625 = vld [vmem:[%s6] sm:$0x3]
        %s626 = scalar_lea.vmem %s3, 4
        %v627 = vld [vmem:[%s626] sm:$0xf]
        %629 = vset.pattern.permute.xlu0 0
        %630 = vperm.xlu0 %629, %v627
        %v631 = vpop.permute.xlu0 %630
        %v634 = vsel %vm484, %v625, 0
        %v637 = vsel %vm488, %v623, 0
        %v640 = vsel %vm488, %v624, 0
        %642 = vmatpush.bf16.msra.mxu0 0
        %643 = vmatpush.bf16.msra.mxu0 0
        %644 = vmatpush.bf16.msra.mxu0 0
        %645 = vmatpush.bf16.msra.mxu0 %v637
        %646 = vmatpush.bf16.msra.mxu0 %v621
        %647 = vmatpush.bf16.msra.mxu0 %v619
        %648 = vmatpush.bf16.msra.mxu0 %v617
        %649 = vmatpush.bf16.msra.mxu0 %v615
        %650 = vmatmul.bf16.gmra.mxu0 %v634
        %v651 = vpop.f32.mrf.mxu0
        %v652 = vadd.f32 %v631, %v651
        %v653 = vpop.f32.mrf.mxu0
        %654 = vdwg.mxu0
        %655 = vmatpush.bf16.msra.mxu0 0
        %656 = vmatpush.bf16.msra.mxu0 0
        %657 = vmatpush.bf16.msra.mxu0 0
        %658 = vmatpush.bf16.msra.mxu0 %v640
        %659 = vmatpush.bf16.msra.mxu0 %v622
        %660 = vmatpush.bf16.msra.mxu0 %v620
        %661 = vmatpush.bf16.msra.mxu0 %v618
        %662 = vmatpush.bf16.msra.mxu0 %v616
        %663 = vmatmul.bf16.gmra.mxu0 %v634
        %v664 = vpop.f32.mrf.mxu0
        %v665 = vadd.f32 %v631, %v664
        %v666 = vpop.f32.mrf.mxu0
        %667 = vdwg.mxu0
        %668 = vst [vmem:[%s298 + $0x10] sm:$0xf] %v652
        %669 = vst [vmem:[%s298 + $0x18] sm:$0xf] %v665
        %v670 = vld [vmem:[%s298] sm:$0xff]
        %v671 = vld [vmem:[%s298 + $0x8] sm:$0xff]
        %v672 = vld [vmem:[%s298 + $0x10] sm:$0xff]
        %v673 = vld [vmem:[%s298 + $0x18] sm:$0xff]
        %s674 = scalar_lea.vmem %s1, 32
        %v675 = vld [vmem:[%s674] sm:$0xff]
        %v676 = vld [vmem:[%s674 + $0x8] sm:$0xff]
        %678 = vset.pattern.permute.xlu0 0
        %679 = vperm.xlu0 %678, %v675
        %v680 = vpop.permute.xlu0 %679
        %683 = vset.pattern.permute.xlu0 0
        %684 = vperm.xlu0 %683, %v676
        %v685 = vpop.permute.xlu0 %684
        %v687 = vmul.f32 %v670, %v680
        %v688 = vmul.f32 %v671, %v680
        %v689 = vmul.f32 %v672, %v685
        %v690 = vmul.f32 %v673, %v685
        %s691 = scalar_lea.vmem %s2, 32
        %v692 = vld [vmem:[%s691] sm:$0xff]
        %v693 = vld [vmem:[%s691 + $0x8] sm:$0xff]
        %695 = vset.pattern.permute.xlu0 0
        %696 = vperm.xlu0 %695, %v692
        %v697 = vpop.permute.xlu0 %696
        %700 = vset.pattern.permute.xlu0 0
        %701 = vperm.xlu0 %700, %v693
        %v702 = vpop.permute.xlu0 %701
        %v704 = vadd.f32 %v687, %v697
        %v705 = vadd.f32 %v688, %v697
        %v706 = vadd.f32 %v689, %v702
        %v707 = vadd.f32 %v690, %v702
        %v708 = vmax.f32 %v704, 0.0
        %v709 = vmax.f32 %v705, 0.0
        %v710 = vmax.f32 %v706, 0.0
        %v711 = vmax.f32 %v707, 0.0
        %712 = vrot.lane.b32.xlu0 %v708, 17
        %v713 = vpop.permute.xlu0 %712
        %714 = vrot.lane.b32.xlu0 %v710, 17
        %v715 = vpop.permute.xlu0 %714
        %716 = vrot.lane.b32.xlu0 %v709, 17
        %v717 = vpop.permute.xlu0 %716
        %718 = vrot.lane.b32.xlu0 %v711, 17
        %v719 = vpop.permute.xlu0 %718
        %v720 = vsel %vm359, %v713, %v717
        %v721 = vsel %vm359, %v715, %v719
        %v722 = vsel %vm359, %v717, %v713
        %v723 = vsel %vm359, %v719, %v715
        %v724 = vmul.f32 %v722, %v363
        %v725 = vmul.f32 %v720, %v364
        %v726 = vmul.f32 %v723, %v363
        %v727 = vmul.f32 %v721, %v364
        %728 = vrot.lane.b32.xlu0 %v708, 16
        %v729 = vpop.permute.xlu0 %728
        %730 = vrot.lane.b32.xlu0 %v710, 16
        %v731 = vpop.permute.xlu0 %730
        %732 = vrot.lane.b32.xlu0 %v709, 16
        %v733 = vpop.permute.xlu0 %732
        %734 = vrot.lane.b32.xlu0 %v711, 16
        %v735 = vpop.permute.xlu0 %734
        %v736 = vsel %vm373, %v729, %v733
        %v737 = vsel %vm373, %v731, %v735
        %v738 = vsel %vm373, %v733, %v729
        %v739 = vsel %vm373, %v735, %v731
        %v740 = vmul.f32 %v738, %v377
        %v741 = vmul.f32 %v736, %v378
        %v742 = vmul.f32 %v739, %v377
        %v743 = vmul.f32 %v737, %v378
        %744 = vrot.lane.b32.xlu0 %v708, 15
        %v745 = vpop.permute.xlu0 %744
        %746 = vrot.lane.b32.xlu0 %v710, 15
        %v747 = vpop.permute.xlu0 %746
        %748 = vrot.lane.b32.xlu0 %v709, 15
        %v749 = vpop.permute.xlu0 %748
        %750 = vrot.lane.b32.xlu0 %v711, 15
        %v751 = vpop.permute.xlu0 %750
        %v752 = vsel %vm387, %v745, %v749
        %v753 = vsel %vm387, %v747, %v751
        %v754 = vsel %vm387, %v749, %v745
        %v755 = vsel %vm387, %v751, %v747
        %v756 = vmul.f32 %v754, %v391
        %v757 = vmul.f32 %v752, %v392
        %v758 = vmul.f32 %v755, %v391
        %v759 = vmul.f32 %v753, %v392
        %760 = vrot.lane.b32.xlu0 %v708, 1
        %v761 = vpop.permute.xlu0 %760
        %762 = vrot.lane.b32.xlu0 %v710, 1
        %v763 = vpop.permute.xlu0 %762
        %764 = vrot.lane.b32.xlu0 %v709, 1
        %v765 = vpop.permute.xlu0 %764
        %766 = vrot.lane.b32.xlu0 %v711, 1
        %v767 = vpop.permute.xlu0 %766
        %v768 = vsel %vm401, %v761, %v765
        %v769 = vsel %vm401, %v763, %v767
        %v770 = vsel %vm401, %v765, %v761
        %v771 = vsel %vm401, %v767, %v763
        %v772 = vmul.f32 %v770, %v405
        %v773 = vmul.f32 %v768, %v406
        %v774 = vmul.f32 %v771, %v405
        %v775 = vmul.f32 %v769, %v406
        %776 = vrot.lane.b32.xlu0 %v708, 127
        %v777 = vpop.permute.xlu0 %776
        %778 = vrot.lane.b32.xlu0 %v710, 127
        %v779 = vpop.permute.xlu0 %778
        %780 = vrot.lane.b32.xlu0 %v709, 127
        %v781 = vpop.permute.xlu0 %780
        %782 = vrot.lane.b32.xlu0 %v711, 127
        %v783 = vpop.permute.xlu0 %782
        %v784 = vsel %vm415, %v777, %v781
        %v785 = vsel %vm415, %v779, %v783
        %v786 = vsel %vm415, %v781, %v777
        %v787 = vsel %vm415, %v783, %v779
        %v788 = vmul.f32 %v784, %v419
        %v789 = vmul.f32 %v786, %v420
        %v790 = vmul.f32 %v785, %v419
        %v791 = vmul.f32 %v787, %v420
        %792 = vrot.lane.b32.xlu0 %v708, 113
        %v793 = vpop.permute.xlu0 %792
        %794 = vrot.lane.b32.xlu0 %v710, 113
        %v795 = vpop.permute.xlu0 %794
        %796 = vrot.lane.b32.xlu0 %v709, 113
        %v797 = vpop.permute.xlu0 %796
        %798 = vrot.lane.b32.xlu0 %v711, 113
        %v799 = vpop.permute.xlu0 %798
        %v800 = vsel %vm429, %v793, %v797
        %v801 = vsel %vm429, %v795, %v799
        %v802 = vsel %vm429, %v797, %v793
        %v803 = vsel %vm429, %v799, %v795
        %v804 = vmul.f32 %v800, %v433
        %v805 = vmul.f32 %v802, %v434
        %v806 = vmul.f32 %v801, %v433
        %v807 = vmul.f32 %v803, %v434
        %808 = vrot.lane.b32.xlu0 %v708, 112
        %v809 = vpop.permute.xlu0 %808
        %810 = vrot.lane.b32.xlu0 %v710, 112
        %v811 = vpop.permute.xlu0 %810
        %812 = vrot.lane.b32.xlu0 %v709, 112
        %v813 = vpop.permute.xlu0 %812
        %814 = vrot.lane.b32.xlu0 %v711, 112
        %v815 = vpop.permute.xlu0 %814
        %v816 = vsel %vm443, %v809, %v813
        %v817 = vsel %vm443, %v811, %v815
        %v818 = vsel %vm443, %v813, %v809
        %v819 = vsel %vm443, %v815, %v811
        %v820 = vmul.f32 %v816, %v447
        %v821 = vmul.f32 %v818, %v448
        %v822 = vmul.f32 %v817, %v447
        %v823 = vmul.f32 %v819, %v448
        %824 = vrot.lane.b32.xlu0 %v708, 111
        %v825 = vpop.permute.xlu0 %824
        %826 = vrot.lane.b32.xlu0 %v710, 111
        %v827 = vpop.permute.xlu0 %826
        %828 = vrot.lane.b32.xlu0 %v709, 111
        %v829 = vpop.permute.xlu0 %828
        %830 = vrot.lane.b32.xlu0 %v711, 111
        %v831 = vpop.permute.xlu0 %830
        %v832 = vsel %vm457, %v825, %v829
        %v833 = vsel %vm457, %v827, %v831
        %v834 = vsel %vm457, %v829, %v825
        %v835 = vsel %vm457, %v831, %v827
        %v836 = vmul.f32 %v832, %v461
        %v837 = vmul.f32 %v834, %v462
        %v838 = vmul.f32 %v833, %v461
        %v839 = vmul.f32 %v835, %v462
        %v840 = vpack.c.bf16 %v726, %v724
        %v841 = vpack.c.bf16 %v727, %v725
        %v842 = vpack.c.bf16 %v742, %v740
        %v843 = vpack.c.bf16 %v743, %v741
        %v844 = vpack.c.bf16 %v758, %v756
        %v845 = vpack.c.bf16 %v759, %v757
        %v846 = vpack.c.bf16 %v774, %v772
        %v847 = vpack.c.bf16 %v775, %v773
        %v848 = vpack.c.bf16 %v710, %v708
        %v849 = vpack.c.bf16 %v711, %v709
        %v850 = vpack.c.bf16 %v790, %v788
        %v851 = vpack.c.bf16 %v791, %v789
        %v852 = vpack.c.bf16 %v806, %v804
        %v853 = vpack.c.bf16 %v807, %v805
        %v854 = vpack.c.bf16 %v822, %v820
        %v855 = vpack.c.bf16 %v823, %v821
        %v856 = vpack.c.bf16 %v838, %v836
        %v857 = vpack.c.bf16 %v839, %v837
        %v858 = vld [vmem:[%s7] sm:$0xf]
        %s859 = scalar_lea.vmem %s3, 8
        %v860 = vld [vmem:[%s859] sm:$0xf]
        %862 = vset.pattern.permute.xlu0 0
        %863 = vperm.xlu0 %862, %v860
        %v864 = vpop.permute.xlu0 %863
        %867 = vst [vmem:[#allocation1] ss:$4 sm:$0xff] %v858
        %v868 = vld.sshfl [vmem:[#allocation1] sm:$0xff pattern:$0x73625140]
        %v869 = vld.sshfl [vmem:[#allocation1 + $0x8] sm:$0xff pattern:$0x73625140]
        %vm871 = vcmask 130048
        %v872 = vsel %vm871, %v869, 0
        %874 = vmatpush.bf16.msra.mxu0 %v854
        %875 = vmatpush.bf16.msra.mxu0 %v852
        %876 = vmatpush.bf16.msra.mxu0 %v850
        %877 = vmatpush.bf16.msra.mxu0 %v848
        %878 = vmatpush.bf16.msra.mxu0 %v846
        %879 = vmatpush.bf16.msra.mxu0 %v844
        %880 = vmatpush.bf16.msra.mxu0 %v842
        %881 = vmatpush.bf16.msra.mxu0 %v840
        %882 = vmatmul.bf16.gmra.mxu0 %v868
        %v883 = vpop.f32.mrf.mxu0
        %v884 = vadd.f32 %v864, %v883
        %v885 = vpop.f32.mrf.mxu0
        %886 = vdwg.mxu0
        %887 = vmatpush.bf16.msra.mxu0 0
        %888 = vmatpush.bf16.msra.mxu0 0
        %889 = vmatpush.bf16.msra.mxu0 0
        %890 = vmatpush.bf16.msra.mxu0 0
        %891 = vmatpush.bf16.msra.mxu0 0
        %892 = vmatpush.bf16.msra.mxu0 0
        %893 = vmatpush.bf16.msra.mxu0 0
        %894 = vmatpush.bf16.msra.mxu0 %v856
        %895 = vmatmul.bf16.gmra.mxu0 %v872
        %v896 = vpop.f32.mrf.mxu0
        %v897 = vadd.f32 %v884, %v896
        %v898 = vpop.f32.mrf.mxu0
        %899 = vdwg.mxu0
        %900 = vmatpush.bf16.msra.mxu0 %v855
        %901 = vmatpush.bf16.msra.mxu0 %v853
        %902 = vmatpush.bf16.msra.mxu0 %v851
        %903 = vmatpush.bf16.msra.mxu0 %v849
        %904 = vmatpush.bf16.msra.mxu0 %v847
        %905 = vmatpush.bf16.msra.mxu0 %v845
        %906 = vmatpush.bf16.msra.mxu0 %v843
        %907 = vmatpush.bf16.msra.mxu0 %v841
        %908 = vmatmul.bf16.gmra.mxu0 %v868
        %v909 = vpop.f32.mrf.mxu0
        %v910 = vadd.f32 %v864, %v909
        %v911 = vpop.f32.mrf.mxu0
        %912 = vdwg.mxu0
        %913 = vmatpush.bf16.msra.mxu0 0
        %914 = vmatpush.bf16.msra.mxu0 0
        %915 = vmatpush.bf16.msra.mxu0 0
        %916 = vmatpush.bf16.msra.mxu0 0
        %917 = vmatpush.bf16.msra.mxu0 0
        %918 = vmatpush.bf16.msra.mxu0 0
        %919 = vmatpush.bf16.msra.mxu0 0
        %920 = vmatpush.bf16.msra.mxu0 %v857
        %921 = vmatmul.bf16.gmra.mxu0 %v872
        %v922 = vpop.f32.mrf.mxu0
        %v923 = vadd.f32 %v910, %v922
        %v924 = vpop.f32.mrf.mxu0
        %925 = vdwg.mxu0
        %v928 = vrot.slane %v897, 4
        %v929 = vrot.slane %v923, 4
        %932 = vst [vmem:[%s298 + $0x10] sm:$0xf0] %v928
        %933 = vst [vmem:[%s298 + $0x18] sm:$0xf0] %v929
        %s934 = sand.u32 %s203, 1
        %s935 = scalar_lea.sflag [#allocation3], %s934
        %s936 = sand.u32 %s203, 1
        %s937 = smul.addr %s936, 32
        %s938 = scalar_lea.vmem [#allocation2], %s937
        // Predicated region
        $region53: #{tpu_custom_call.1} parent=51 // pred_check
          %p939 = pneg %p213
        $region54: #{tpu_custom_call.1} parent=51 // pred_check_branch
          %941 = sbr.rel (%p939) target = $region56
        $region55: #{tpu_custom_call.1} parent=51 // pred_region
          %943 = vsyncadd %s935, 0
          %s944 = smul.addr %s22, 4
          %s945 = smul.addr %s944, 8
          %s946 = scalar_lea.hbm %s8, %s945
          %s947 = sshll.u32 %s938, 4
          %s948 = int_to_ptr.vmem [resolvable:$true] %s947
          %s949 = sshll.u32 %s946, 4
          %s950 = int_to_ptr.hbm [resolvable:$true] %s949
          %955 = dma.vmem_to_hbm [thread:$0]  %s948, 512, %s950, %s935, 256, 256, 16
        $region56: #{tpu_custom_call.1} parent=51 // pred_fallthru
          _
      $region52: #{tpu_custom_call.1} parent=5 // pred_fallthru
        _
      %p956 = scmp.le.s32.totalorder 2, %s17
      // Predicated region
      $region57: #{tpu_custom_call.1} parent=5 // pred_check
        %p957 = pneg %p956
      $region58: #{tpu_custom_call.1} parent=5 // pred_check_branch
        %959 = sbr.rel (%p957) target = $region60
      $region59: #{tpu_custom_call.1} parent=5 // pred_region
        %s960 = ssub.s32 %s17, 2
        // Predicated region
        $region61: #{tpu_custom_call.1} parent=59 // pred_check
          %p961 = pneg %p219
        $region62: #{tpu_custom_call.1} parent=59 // pred_check_branch
          %963 = sbr.rel (%p961) target = $region64
        $region63: #{tpu_custom_call.1} parent=59 // pred_region
          %s964 = sand.u32 %s204, 1
          %s965 = scalar_lea.sflag [#allocation3], %s964
          %s966 = sand.u32 %s204, 1
          %s967 = smul.addr %s966, 32
          %s968 = scalar_lea.vmem [#allocation2], %s967
          %970 = dma.done %s965, 512
        $region64: #{tpu_custom_call.1} parent=59 // pred_fallthru
          _
      $region60: #{tpu_custom_call.1} parent=5 // pred_fallthru
        _
    $region6: #{tpu_custom_call.1} parent=1 // loop_footer
      %s21 = sadd.s32 1, %s17
    $region7: #{tpu_custom_call.1} parent=1 // loop_footer_branch
      %16 = sbr.rel target = $region3
    $region8: #{tpu_custom_call.1} parent=1 // loop_exit
      _
    %971 = vsyncpa [#allocation3], 1
    %s972 = scalar_lea.sflag [#allocation3], 1
    %973 = vsyncpa %s972, 1

</llo_original>
